<compile_context>
chip_gen: v7x
topology: tpu7x:2x2x1
jax: 0.10.0
libtpu: 0.0.40
codegen_flags: <defaults>
</compile_context>

<pallas_src>
import numpy as np
import jax
import jax.numpy as jnp
from jax.experimental import pallas as pl
from jax.experimental.pallas import tpu as pltpu


def _compute_shifts(bins_per_semitone, harmonics):
    # Identical formula to the PyTorch __init__.
    return [int(np.round(12 * bins_per_semitone * np.log2(float(h)))) for h in harmonics]


def _vmem_caps():
    """(physical VMEM bytes, per-kernel budget with headroom)."""
    cap = 64 * 2 ** 20  # conservative default = v7x per-TensorCore VMEM
    try:
        info = pltpu.get_tpu_info()
        cap = int(getattr(info, "vmem_capacity_bytes", cap)) or cap
    except Exception:
        pass
    # Leave ~25% headroom for compiler-internal scratch / semaphores:
    #   v7x 64 MiB -> ~48 MiB budget, v5e/v6e 128 MiB -> ~96 MiB budget.
    return cap, (cap * 3) // 4


def _pick_time_tile(t_padded, col_bytes, budget, batch):
    """Largest 128-multiple divisor of t_padded whose double-buffered blocks fit
    `budget`, while keeping the grid at least 2 steps (v7x dual TensorCore)."""
    m = t_padded // 128
    for d in range(m, 0, -1):
        if m % d != 0:
            continue
        t = d * 128
        # 2x (in + out block) for double-buffering plus slack for in-kernel
        # slab values.
        if int(2.5 * t * col_bytes) > budget:
            continue
        n_t = m // d
        if batch * n_t < 2 and batch * m >= 2:
            # Would collapse the grid to a single step even though >= 2 steps
            # are possible; keep both v7x TensorCores busy instead.
            continue
        return t
    return 128


def _make_kernel(shifts, freq_bins, n_out, t_tile):
    # Static per-harmonic row windows: output rows [f0, f1) hold input rows
    # [f0+shift, f1+shift); all other rows are zero.
    windows = []
    for s in shifts:
        f0 = min(max(0, -s), n_out)
        f1 = max(f0, min(n_out, freq_bins - s))
        windows.append((f0, f1, s))

    def kernel(x_ref, o_ref):
        # x_ref block: (1, freq_bins, t_tile)
        # o_ref block: (1, n_harmonics, n_out, t_tile)
        for h, (f0, f1, s) in enumerate(windows):
            n_valid = f1 - f0
            if n_valid == n_out:
                # Whole slab is valid: direct ref->ref copy, single store.
                o_ref[0, h, :, :] = x_ref[0, f0 + s:f1 + s, :]
            elif n_valid <= 0:
                o_ref[0, h, :, :] = jnp.zeros((n_out, t_tile), o_ref.dtype)
            else:
                # Build the full-height slab as ONE value and issue a single
                # store (no sub-8-row masked boundary stores per harmonic).
                pieces = []
                if f0 > 0:
                    pieces.append(jnp.zeros((f0, t_tile), o_ref.dtype))
                pieces.append(x_ref[0, f0 + s:f1 + s, :])
                if f1 < n_out:
                    pieces.append(jnp.zeros((n_out - f1, t_tile), o_ref.dtype))
                o_ref[0, h, :, :] = jnp.concatenate(pieces, axis=0)

    return kernel


def harmonic_stacking_pallas(x, bins_per_semitone, harmonics, n_output_freqs):
    """x: (batch, freq_bins, time_frames) ->
       (batch, n_harmonics, min(freq_bins, n_output_freqs), time_frames)."""
    assert x.ndim == 3, "x must be (batch, freq_bins, time_frames)"
    B, F, T = x.shape
    shifts = _compute_shifts(bins_per_semitone, harmonics)
    H = len(shifts)
    # Match torch's x[:, :, :n_output_freqs, :] slice exactly (handles F < n_out).
    n_out = min(n_output_freqs, F)
    itemsize = jnp.dtype(x.dtype).itemsize

    # Lane-align the time axis so every store is a dense vst (no full-extent
    # fallback block that could blow VMEM for long, unaligned T).
    t_padded = ((T + 127) // 128) * 128
    if t_padded != T:
        x = jnp.pad(x, ((0, 0), (0, 0), (0, t_padded - T)))

    cap, budget = _vmem_caps()
    col_bytes = (F + H * n_out) * itemsize            # in + out bytes per time column
    t_tile = _pick_time_tile(t_padded, col_bytes, budget, B)
    n_t = t_padded // t_tile

    kernel = _make_kernel(shifts, F, n_out, t_tile)

    block_pair = col_bytes * t_tile                   # one in-block + one out-block
    vmem_limit = int(min(budget, max(32 * 2 ** 20, 3 * block_pair)))
    # Never set the limit below what a double-buffered step actually needs.
    vmem_limit = min(cap, max(vmem_limit, int(2.25 * block_pair)))

    cost = pl.CostEstimate(
        flops=0,
        transcendentals=0,
        bytes_accessed=int(B * t_padded * itemsize * (F + H * n_out)),
    )

    out = pl.pallas_call(
        kernel,
        out_shape=jax.ShapeDtypeStruct((B, H, n_out, t_padded), x.dtype),
        grid_spec=pltpu.PrefetchScalarGridSpec(
            num_scalar_prefetch=0,
            grid=(B, n_t),
            in_specs=[pl.BlockSpec((1, F, t_tile), lambda b, t: (b, 0, t))],
            out_specs=pl.BlockSpec(
                (1, H, n_out, t_tile), lambda b, t: (b, 0, 0, t)
            ),
        ),
        compiler_params=pltpu.CompilerParams(
            dimension_semantics=("parallel", "parallel"),
            vmem_limit_bytes=vmem_limit,
        ),
        cost_estimate=cost,
    )(x)

    if t_padded != T:
        out = out[..., :T]
    return out


def _numpy_reference(xn, bins_per_semitone, harmonics, n_output_freqs):
    """Pure-numpy reference with identical semantics to the PyTorch forward."""
    B, F, T = xn.shape
    shifts = _compute_shifts(bins_per_semitone, harmonics)
    n_out = min(n_output_freqs, F)
    ref = np.zeros((B, len(shifts), n_out, T), dtype=xn.dtype)
    for h, s in enumerate(shifts):
        for f in range(n_out):
            src = f + s
            if 0 <= src < F:
                ref[:, h, f, :] = xn[:, src, :]
    return ref


if __name__ == "__main__":
    key = jax.random.PRNGKey(0)

    # Small shapes consistent with the module's forward (batch, freq_bins, time).
    B, F, T = 2, 64, 256
    bins_per_semitone = 1
    harmonics = [0.5, 1, 2, 3, 4]   # shifts [-12, 0, 12, 19, 24]
    n_output_freqs = 48

    x = jax.random.normal(key, (B, F, T), dtype=jnp.float32)
    out = harmonic_stacking_pallas(x, bins_per_semitone, harmonics, n_output_freqs)
    out = jax.block_until_ready(out)
    ref = _numpy_reference(np.asarray(x), bins_per_semitone, harmonics, n_output_freqs)
    np.testing.assert_allclose(np.asarray(out), ref, rtol=0, atol=0)

    # Non-128-aligned time dimension exercises the wrapper padding path.
    x2 = jax.random.normal(jax.random.PRNGKey(0), (1, 64, 100), dtype=jnp.float32)
    out2 = jax.block_until_ready(
        harmonic_stacking_pallas(x2, bins_per_semitone, harmonics, n_output_freqs)
    )
    ref2 = _numpy_reference(np.asarray(x2), bins_per_semitone, harmonics, n_output_freqs)
    np.testing.assert_allclose(np.asarray(out2), ref2, rtol=0, atol=0)

    print("KERNEL_OK")
</pallas_src>

<mosaic_0001>
module attributes {stable_mosaic.version = 11 : i64} {
  func.func @kernel(%arg0: i32, %arg1: i32, %arg2: memref<1x64x256xf32, #tpu.memory_space<vmem>>, %arg3: memref<1x5x48x256xf32, #tpu.memory_space<vmem>>) attributes {dimension_semantics = [#tpu.dimension_semantics<parallel>, #tpu.dimension_semantics<parallel>], iteration_bounds = array<i64: 2, 1>, scalar_prefetch = 0 : i64, scratch_operands = 0 : i64, tpu.core_type = #tpu.core_type<tc>, window_params = [{transform_indices = @transform_0, window_bounds = array<i64: 1, 64, 256>}, {transform_indices = @transform_1, window_bounds = array<i64: 1, 5, 48, 256>}]} {
    %cst = arith.constant 0.000000e+00 : f32
    %0 = vector.broadcast %cst : f32 to vector<12x256xf32>
    %c0 = arith.constant 0 : index
    %c0_0 = arith.constant 0 : index
    %c0_1 = arith.constant 0 : index
    %1 = vector.load %arg2[%c0, %c0_0, %c0_1] : memref<1x64x256xf32, #tpu.memory_space<vmem>>, vector<1x36x256xf32>
    %2 = vector.shape_cast %1 : vector<1x36x256xf32> to vector<36x256xf32>
    %3 = tpu.concatenate %0, %2 in 0 : vector<12x256xf32>, vector<36x256xf32> -> vector<48x256xf32>
    %c0_2 = arith.constant 0 : index
    %c0_3 = arith.constant 0 : index
    %c0_4 = arith.constant 0 : index
    %c0_5 = arith.constant 0 : index
    %4 = vector.load %arg3[%c0_2, %c0_3, %c0_4, %c0_5] : memref<1x5x48x256xf32, #tpu.memory_space<vmem>>, vector<1x1x48x256xf32>
    %5 = vector.shape_cast %4 : vector<1x1x48x256xf32> to vector<48x256xf32>
    %6 = vector.shape_cast %3 : vector<48x256xf32> to vector<1x1x48x256xf32>
    tpu.vector_store %arg3[%c0_2, %c0_3, %c0_4, %c0_5], %6 {strides = array<i32>} : memref<1x5x48x256xf32, #tpu.memory_space<vmem>>, vector<1x1x48x256xf32>,
    %c0_6 = arith.constant 0 : index
    %c0_7 = arith.constant 0 : index
    %c0_8 = arith.constant 0 : index
    %7 = vector.load %arg2[%c0_6, %c0_7, %c0_8] : memref<1x64x256xf32, #tpu.memory_space<vmem>>, vector<1x48x256xf32>
    %8 = vector.shape_cast %7 : vector<1x48x256xf32> to vector<48x256xf32>
    %c0_9 = arith.constant 0 : index
    %c1 = arith.constant 1 : index
    %c0_10 = arith.constant 0 : index
    %c0_11 = arith.constant 0 : index
    %9 = vector.load %arg3[%c0_9, %c1, %c0_10, %c0_11] : memref<1x5x48x256xf32, #tpu.memory_space<vmem>>, vector<1x1x48x256xf32>
    %10 = vector.shape_cast %9 : vector<1x1x48x256xf32> to vector<48x256xf32>
    %11 = vector.shape_cast %8 : vector<48x256xf32> to vector<1x1x48x256xf32>
    tpu.vector_store %arg3[%c0_9, %c1, %c0_10, %c0_11], %11 {strides = array<i32>} : memref<1x5x48x256xf32, #tpu.memory_space<vmem>>, vector<1x1x48x256xf32>,
    %c0_12 = arith.constant 0 : index
    %c12 = arith.constant 12 : index
    %c0_13 = arith.constant 0 : index
    %12 = vector.load %arg2[%c0_12, %c12, %c0_13] : memref<1x64x256xf32, #tpu.memory_space<vmem>>, vector<1x48x256xf32>
    %13 = vector.shape_cast %12 : vector<1x48x256xf32> to vector<48x256xf32>
    %c0_14 = arith.constant 0 : index
    %c2 = arith.constant 2 : index
    %c0_15 = arith.constant 0 : index
    %c0_16 = arith.constant 0 : index
    %14 = vector.load %arg3[%c0_14, %c2, %c0_15, %c0_16] : memref<1x5x48x256xf32, #tpu.memory_space<vmem>>, vector<1x1x48x256xf32>
    %15 = vector.shape_cast %14 : vector<1x1x48x256xf32> to vector<48x256xf32>
    %16 = vector.shape_cast %13 : vector<48x256xf32> to vector<1x1x48x256xf32>
    tpu.vector_store %arg3[%c0_14, %c2, %c0_15, %c0_16], %16 {strides = array<i32>} : memref<1x5x48x256xf32, #tpu.memory_space<vmem>>, vector<1x1x48x256xf32>,
    %c0_17 = arith.constant 0 : index
    %c19 = arith.constant 19 : index
    %c0_18 = arith.constant 0 : index
    %17 = vector.load %arg2[%c0_17, %c19, %c0_18] : memref<1x64x256xf32, #tpu.memory_space<vmem>>, vector<1x45x256xf32>
    %18 = vector.shape_cast %17 : vector<1x45x256xf32> to vector<45x256xf32>
    %cst_19 = arith.constant 0.000000e+00 : f32
    %19 = vector.broadcast %cst_19 : f32 to vector<3x256xf32>
    %20 = tpu.concatenate %18, %19 in 0 : vector<45x256xf32>, vector<3x256xf32> -> vector<48x256xf32>
    %c0_20 = arith.constant 0 : index
    %c3 = arith.constant 3 : index
    %c0_21 = arith.constant 0 : index
    %c0_22 = arith.constant 0 : index
    %21 = vector.load %arg3[%c0_20, %c3, %c0_21, %c0_22] : memref<1x5x48x256xf32, #tpu.memory_space<vmem>>, vector<1x1x48x256xf32>
    %22 = vector.shape_cast %21 : vector<1x1x48x256xf32> to vector<48x256xf32>
    %23 = vector.shape_cast %20 : vector<48x256xf32> to vector<1x1x48x256xf32>
    tpu.vector_store %arg3[%c0_20, %c3, %c0_21, %c0_22], %23 {strides = array<i32>} : memref<1x5x48x256xf32, #tpu.memory_space<vmem>>, vector<1x1x48x256xf32>,
    %c0_23 = arith.constant 0 : index
    %c24 = arith.constant 24 : index
    %c0_24 = arith.constant 0 : index
    %24 = vector.load %arg2[%c0_23, %c24, %c0_24] : memref<1x64x256xf32, #tpu.memory_space<vmem>>, vector<1x40x256xf32>
    %25 = vector.shape_cast %24 : vector<1x40x256xf32> to vector<40x256xf32>
    %cst_25 = arith.constant 0.000000e+00 : f32
    %26 = vector.broadcast %cst_25 : f32 to vector<8x256xf32>
    %27 = tpu.concatenate %25, %26 in 0 : vector<40x256xf32>, vector<8x256xf32> -> vector<48x256xf32>
    %c0_26 = arith.constant 0 : index
    %c4 = arith.constant 4 : index
    %c0_27 = arith.constant 0 : index
    %c0_28 = arith.constant 0 : index
    %28 = vector.load %arg3[%c0_26, %c4, %c0_27, %c0_28] : memref<1x5x48x256xf32, #tpu.memory_space<vmem>>, vector<1x1x48x256xf32>
    %29 = vector.shape_cast %28 : vector<1x1x48x256xf32> to vector<48x256xf32>
    %30 = vector.shape_cast %27 : vector<48x256xf32> to vector<1x1x48x256xf32>
    tpu.vector_store %arg3[%c0_26, %c4, %c0_27, %c0_28], %30 {strides = array<i32>} : memref<1x5x48x256xf32, #tpu.memory_space<vmem>>, vector<1x1x48x256xf32>,
    return
  }
  func.func @transform_0(%arg0: i32, %arg1: i32) -> (i32, i32, i32) {
    %c0_i32 = arith.constant 0 : i32
    %c0_i32_0 = arith.constant 0 : i32
    return %arg0, %c0_i32, %arg1 : i32, i32, i32
  }
  func.func @transform_1(%arg0: i32, %arg1: i32) -> (i32, i32, i32, i32) {
    %c0_i32 = arith.constant 0 : i32
    %c0_i32_0 = arith.constant 0 : i32
    %c0_i32_1 = arith.constant 0 : i32
    return %arg0, %c0_i32, %c0_i32_0, %arg1 : i32, i32, i32, i32
  }
}

</mosaic_0001>

<llo_original>
// kernel: tpu_custom_call.1
$region0: #{tpu_custom_call.1}
  #allocation0 [shape = 'u32[]', space=smem, size = 0x4, offset = 0x4, fixed_abs, tag = 'smem constant byte address 0x4 - core index']
  #allocation1 [shape = 'u32[144,128]{1,0:T(1,128)}', space=vmem, size = 0x12000, scoped, tag = 'internal scratch']
  %s0 = inlined_call_operand.hbm [shape: f32[2,64,256], index: 0, kind: input, shape index: {}]
  %s1 = inlined_call_operand.hbm [shape: f32[2,5,48,256], index: 1, kind: output, shape index: {}]
  %s2 = sld [smem:[#allocation0]]
  $region41: #{tpu_custom_call.1} parent=0
    _
  %s4 = ssub.s32 1, %s2
  %s5 = scalar_select 0, %s4, %s2
  $region1: #{tpu_custom_call.1} parent=0
    #allocation2 [shape = 'u8[131072]{0}', space=vmem, size = 0x20000, scoped, tag = 'input window, operand 0']
    #allocation3 [shape = 's32[2]{0}', space=sflag, size = 0x8, scoped, tag = 'scoped memory for tpu_custom_call.1']
    #allocation4 [shape = 's32[2]{0}', space=sflag, size = 0x8, scoped, tag = 'scoped memory for tpu_custom_call.1']
    #allocation5 [shape = 'u8[491520]{0}', space=vmem, size = 0x78000, scoped, tag = 'output window, operand 0']
    %6 = vsyncpa [#allocation3], 0
    %s7 = scalar_lea.sflag [#allocation3], 1
    %8 = vsyncpa %s7, 0
    %9 = vsyncpa [#allocation4], 0
    %s10 = scalar_lea.sflag [#allocation4], 1
    %11 = vsyncpa %s10, 0
    loop: start=0, step=1, limit=4
    $region2: #{tpu_custom_call.1} parent=1 // loop_pre_header
      _
    $region3: #{tpu_custom_call.1} parent=1 // loop_header
      %s13 = sphi 0, %s17
      %p14 = scmp.ge.s32.totalorder %s13, 4
      %s20 = sphi 0, %s32
      %s21 = sphi 0, %s28
      %s22 = sphi 0, %s20
      %s23 = sphi 0, %s21
      %s24 = sphi 0, %s22
      %s25 = sphi 0, %s23
      %s37 = sphi 0, %s39
      %s40 = sphi 0, %s37
      %s41 = sphi 0, %s40
      %s57 = sphi 0, %s41
      %s65 = sphi 0, %s67
      %s68 = sphi 0, %s65
      %s69 = sphi 0, %s68
      %s85 = sphi 0, %s69
    $region4: #{tpu_custom_call.1} parent=1 // loop_header_branch
      %16 = sbr.rel (%p14) target = $region8
    $region5: #{tpu_custom_call.1} parent=1 // loop_body
      %s18 = ssub.s32 %s13, 1
      %s19 = ssub.s32 %s13, 2
      %s26 = sadd.s32 1, %s21
      %p27 = scmp.ge.s32.totalorder %s26, 1
      %s28 = scalar_select %p27, 0, %s26
      %s29 = sadd.s32 1, %s20
      %s30 = scalar_select %p27, %s29, %s20
      %p31 = scmp.ge.s32.totalorder %s30, 2
      %s32 = scalar_select %p31, 0, %s30
      %s33 = ssub.s32 %s20, %s32
      %s34 = ssub.s32 %s21, %s28
      %s35 = sor.u32 %s33, %s34
      %p36 = scmp.eq.s32.totalorder %s35, 0
      %s38 = sadd.s32 %s37, 1
      %s39 = scalar_select %p36, %s37, %s38
      %p42 = pneg %p36
      %p43 = scmp.eq.s32.totalorder %s13, 1
      %p44 = por %p42, %p43
      %p45 = scmp.ne.s32.totalorder %s37, %s40
      %p46 = scmp.eq.s32.totalorder %s13, 0
      %p47 = por %p45, %p46
      %p48 = scmp.ne.s32.totalorder %s37, %s40
      %p49 = scmp.eq.s32.totalorder %s18, 1
      %p50 = por %p48, %p49
      %p51 = scmp.ne.s32.totalorder %s40, %s41
      %p52 = scmp.eq.s32.totalorder %s18, 0
      %p53 = por %p51, %p52
      %p54 = scmp.ne.s32.totalorder %s40, %s41
      %p55 = scmp.eq.s32.totalorder %s19, 1
      %p56 = por %p54, %p55
      %p58 = scmp.ne.s32.totalorder %s41, %s57
      %p59 = scmp.eq.s32.totalorder %s19, 0
      %p60 = por %p58, %p59
      %s61 = ssub.s32 %s20, %s32
      %s62 = ssub.s32 %s21, %s28
      %s63 = sor.u32 %s61, %s62
      %p64 = scmp.eq.s32.totalorder %s63, 0
      %s66 = sadd.s32 %s65, 1
      %s67 = scalar_select %p64, %s65, %s66
      %p70 = pneg %p64
      %p71 = scmp.eq.s32.totalorder %s13, 1
      %p72 = por %p70, %p71
      %p73 = scmp.ne.s32.totalorder %s65, %s68
      %p74 = scmp.eq.s32.totalorder %s13, 0
      %p75 = por %p73, %p74
      %p76 = scmp.ne.s32.totalorder %s65, %s68
      %p77 = scmp.eq.s32.totalorder %s18, 1
      %p78 = por %p76, %p77
      %p79 = scmp.ne.s32.totalorder %s68, %s69
      %p80 = scmp.eq.s32.totalorder %s18, 0
      %p81 = por %p79, %p80
      %p82 = scmp.ne.s32.totalorder %s68, %s69
      %p83 = scmp.eq.s32.totalorder %s19, 1
      %p84 = por %p82, %p83
      %p86 = scmp.ne.s32.totalorder %s69, %s85
      %p87 = scmp.eq.s32.totalorder %s19, 0
      %p88 = por %p86, %p87
      %p89 = scmp.le.s32.totalorder 1, %s13
      %p90 = scmp.lt.s32.totalorder %s13, 3
      %p91 = pnand %p89, %p90
      %p92 = pneg %p91
      // Predicated region
      $region9: #{tpu_custom_call.1} parent=5 // pred_check
        _
      $region10: #{tpu_custom_call.1} parent=5 // pred_check_branch
        %94 = sbr.rel (%p91) target = $region12
      $region11: #{tpu_custom_call.1} parent=5 // pred_region
        %s95 = ssub.s32 %s13, 1
      $region12: #{tpu_custom_call.1} parent=5 // pred_fallthru
        _
      %p96 = scmp.lt.s32.totalorder %s13, 2
      // Predicated region
      $region13: #{tpu_custom_call.1} parent=5 // pred_check
        %p97 = pneg %p96
      $region14: #{tpu_custom_call.1} parent=5 // pred_check_branch
        %99 = sbr.rel (%p97) target = $region16
      $region15: #{tpu_custom_call.1} parent=5 // pred_region
        // Predicated region
        $region17: #{tpu_custom_call.1} parent=15 // pred_check
          %p100 = pneg %p47
        $region18: #{tpu_custom_call.1} parent=15 // pred_check_branch
          %102 = sbr.rel (%p100) target = $region20
        $region19: #{tpu_custom_call.1} parent=15 // pred_region
          %s103 = sand.u32 %s37, 1
          %s104 = scalar_lea.sflag [#allocation3], %s103
          %s105 = sand.u32 %s37, 1
          %s106 = smul.addr %s105, 128
          %s107 = scalar_lea.vmem [#allocation2], %s106
          %s108 = smul.u32 2, %s21
          %s110 = ssub.s32 2048, 2048
          %111 = vsyncadd %s104, %s110
          %s112 = smul.addr %s20, 16
          %s113 = sadd.s32 %s108, %s112
          %s114 = smul.addr %s113, 128
          %s115 = scalar_lea.hbm %s0, %s114
          %s116 = sshll.u32 %s107, 4
          %s117 = int_to_ptr.vmem [resolvable:$true] %s116
          %122 = dma.hbm_to_vmem [thread:$0]  %s115, 2048, %s117, %s104, 256, 256, 16
        $region20: #{tpu_custom_call.1} parent=15 // pred_fallthru
          _
      $region16: #{tpu_custom_call.1} parent=5 // pred_fallthru
        _
      %p123 = scmp.le.s32.totalorder 1, %s13
      %p124 = scmp.lt.s32.totalorder %s13, 3
      %p125 = pnand %p123, %p124
      %p126 = pneg %p125
      // Predicated region
      $region21: #{tpu_custom_call.1} parent=5 // pred_check
        _
      $region22: #{tpu_custom_call.1} parent=5 // pred_check_branch
        %128 = sbr.rel (%p125) target = $region24
      $region23: #{tpu_custom_call.1} parent=5 // pred_region
        %s129 = ssub.s32 %s13, 1
        %s130 = sand.u32 %s40, 1
        %s131 = scalar_lea.sflag [#allocation3], %s130
        %s132 = sand.u32 %s40, 1
        %s133 = smul.addr %s132, 128
        %s134 = scalar_lea.vmem [#allocation2], %s133
        // Predicated region
        $region25: #{tpu_custom_call.1} parent=23 // pred_check
          %p135 = pneg %p53
        $region26: #{tpu_custom_call.1} parent=23 // pred_check_branch
          %137 = sbr.rel (%p135) target = $region28
        $region27: #{tpu_custom_call.1} parent=23 // pred_region
          %138 = dma.done %s131, 2048
        $region28: #{tpu_custom_call.1} parent=23 // pred_fallthru
          _
        %s139 = sand.u32 %s40, 1
        %s140 = scalar_lea.sflag [#allocation3], %s139
        %s141 = sand.u32 %s40, 1
        %s142 = smul.addr %s141, 128
        %s143 = scalar_lea.vmem [#allocation2], %s142
        %p144 = pneg %p53
        %p145 = pneg %p50
        %p146 = pneg %p81
        %p147 = pneg %p78
        %s148 = sand.u32 %s68, 1
        %s149 = scalar_lea.sflag [#allocation4], %s148
        %s150 = sand.u32 %s68, 1
        %s151 = smul.addr %s150, 480
        %s152 = scalar_lea.vmem [#allocation5], %s151
        %s153 = smul.u32 2, %s23
        %s154 = smul.u32 2, %s23
        %v155 = vld [vmem:[%s134] sm:$0xff]
        %v156 = vld [vmem:[%s134 + $0x8] sm:$0xff]
        %v157 = vld [vmem:[%s134 + $0x10] sm:$0xff]
        %v158 = vld [vmem:[%s134 + $0x18] sm:$0xff]
        %v159 = vld [vmem:[%s134 + $0x20] sm:$0xff]
        %v160 = vld [vmem:[%s134 + $0x28] sm:$0xff]
        %v161 = vld [vmem:[%s134 + $0x30] sm:$0xff]
        %v162 = vld [vmem:[%s134 + $0x38] sm:$0xff]
        %v163 = vld [vmem:[%s134 + $0x40] sm:$0xf]
        %v164 = vld [vmem:[%s134 + $0x48] sm:$0xf]
        %vm175 = vcmask 1043456
        %v176 = vrot.slane %v155, 4
        %v177 = vrot.slane %v156, 4
        %v178 = vrot.slane %v157, 4
        %v179 = vsel %vm175, %v176, %v178
        %v180 = vrot.slane %v158, 4
        %v181 = vsel %vm175, %v177, %v180
        %v182 = vrot.slane %v159, 4
        %v183 = vsel %vm175, %v178, %v182
        %v184 = vrot.slane %v160, 4
        %v185 = vsel %vm175, %v180, %v184
        %v186 = vrot.slane %v161, 4
        %v187 = vsel %vm175, %v182, %v186
        %v188 = vrot.slane %v162, 4
        %v189 = vsel %vm175, %v184, %v188
        %v190 = vrot.slane %v163, 4
        %v191 = vsel %vm175, %v186, %v190
        %v192 = vrot.slane %v164, 4
        %v193 = vsel %vm175, %v188, %v192
        %v204 = vsel %vm175, 0.0, %v176
        %v205 = vsel %vm175, 0.0, %v177
        %206 = vst [vmem:[%s152] sm:$0xff] 0.0
        %207 = vst [vmem:[%s152 + $0x8] sm:$0xff] 0.0
        %208 = vst [vmem:[%s152 + $0x10] sm:$0xff] %v204
        %209 = vst [vmem:[%s152 + $0x18] sm:$0xff] %v205
        %210 = vst [vmem:[%s152 + $0x20] sm:$0xff] %v179
        %211 = vst [vmem:[%s152 + $0x28] sm:$0xff] %v181
        %212 = vst [vmem:[%s152 + $0x30] sm:$0xff] %v183
        %213 = vst [vmem:[%s152 + $0x38] sm:$0xff] %v185
        %214 = vst [vmem:[%s152 + $0x40] sm:$0xff] %v187
        %215 = vst [vmem:[%s152 + $0x48] sm:$0xff] %v189
        %216 = vst [vmem:[%s152 + $0x50] sm:$0xff] %v191
        %217 = vst [vmem:[%s152 + $0x58] sm:$0xff] %v193
        %v218 = vld [vmem:[%s134] sm:$0xff]
        %v219 = vld [vmem:[%s134 + $0x8] sm:$0xff]
        %v220 = vld [vmem:[%s134 + $0x10] sm:$0xff]
        %v221 = vld [vmem:[%s134 + $0x18] sm:$0xff]
        %v222 = vld [vmem:[%s134 + $0x20] sm:$0xff]
        %v223 = vld [vmem:[%s134 + $0x28] sm:$0xff]
        %v224 = vld [vmem:[%s134 + $0x30] sm:$0xff]
        %v225 = vld [vmem:[%s134 + $0x38] sm:$0xff]
        %v226 = vld [vmem:[%s134 + $0x40] sm:$0xff]
        %v227 = vld [vmem:[%s134 + $0x48] sm:$0xff]
        %v228 = vld [vmem:[%s134 + $0x50] sm:$0xff]
        %v229 = vld [vmem:[%s134 + $0x58] sm:$0xff]
        %s230 = scalar_lea.vmem %s152, 96 [#allocation5]
        %231 = vst [vmem:[%s230] sm:$0xff] %v218
        %232 = vst [vmem:[%s230 + $0x8] sm:$0xff] %v219
        %233 = vst [vmem:[%s230 + $0x10] sm:$0xff] %v220
        %234 = vst [vmem:[%s230 + $0x18] sm:$0xff] %v221
        %235 = vst [vmem:[%s230 + $0x20] sm:$0xff] %v222
        %236 = vst [vmem:[%s230 + $0x28] sm:$0xff] %v223
        %237 = vst [vmem:[%s230 + $0x30] sm:$0xff] %v224
        %238 = vst [vmem:[%s230 + $0x38] sm:$0xff] %v225
        %239 = vst [vmem:[%s230 + $0x40] sm:$0xff] %v226
        %240 = vst [vmem:[%s230 + $0x48] sm:$0xff] %v227
        %241 = vst [vmem:[%s230 + $0x50] sm:$0xff] %v228
        %242 = vst [vmem:[%s230 + $0x58] sm:$0xff] %v229
        %v243 = vld [vmem:[%s134 + $0x10] sm:$0xf0]
        %v244 = vld [vmem:[%s134 + $0x18] sm:$0xf0]
        %v245 = vld [vmem:[%s134 + $0x20] sm:$0xff]
        %v246 = vld [vmem:[%s134 + $0x28] sm:$0xff]
        %v247 = vld [vmem:[%s134 + $0x30] sm:$0xff]
        %v248 = vld [vmem:[%s134 + $0x38] sm:$0xff]
        %v249 = vld [vmem:[%s134 + $0x40] sm:$0xff]
        %v250 = vld [vmem:[%s134 + $0x48] sm:$0xff]
        %v251 = vld [vmem:[%s134 + $0x50] sm:$0xff]
        %v252 = vld [vmem:[%s134 + $0x58] sm:$0xff]
        %v253 = vld [vmem:[%s134 + $0x60] sm:$0xff]
        %v254 = vld [vmem:[%s134 + $0x68] sm:$0xff]
        %v255 = vld [vmem:[%s134 + $0x70] sm:$0xf]
        %v256 = vld [vmem:[%s134 + $0x78] sm:$0xf]
        %v271 = vrot.slane %v243, 4
        %v272 = vrot.slane %v245, 4
        %v273 = vsel %vm175, %v271, %v272
        %v274 = vrot.slane %v244, 4
        %v275 = vrot.slane %v246, 4
        %v276 = vsel %vm175, %v274, %v275
        %v277 = vrot.slane %v247, 4
        %v278 = vsel %vm175, %v272, %v277
        %v279 = vrot.slane %v248, 4
        %v280 = vsel %vm175, %v275, %v279
        %v281 = vrot.slane %v249, 4
        %v282 = vsel %vm175, %v277, %v281
        %v283 = vrot.slane %v250, 4
        %v284 = vsel %vm175, %v279, %v283
        %v285 = vrot.slane %v251, 4
        %v286 = vsel %vm175, %v281, %v285
        %v287 = vrot.slane %v252, 4
        %v288 = vsel %vm175, %v283, %v287
        %v289 = vrot.slane %v253, 4
        %v290 = vsel %vm175, %v285, %v289
        %v291 = vrot.slane %v254, 4
        %v292 = vsel %vm175, %v287, %v291
        %v293 = vrot.slane %v255, 4
        %v294 = vsel %vm175, %v289, %v293
        %v295 = vrot.slane %v256, 4
        %v296 = vsel %vm175, %v291, %v295
        %s309 = scalar_lea.vmem %s152, 192 [#allocation5]
        %310 = vst [vmem:[%s309] sm:$0xff] %v273
        %311 = vst [vmem:[%s309 + $0x8] sm:$0xff] %v276
        %312 = vst [vmem:[%s309 + $0x10] sm:$0xff] %v278
        %313 = vst [vmem:[%s309 + $0x18] sm:$0xff] %v280
        %314 = vst [vmem:[%s309 + $0x20] sm:$0xff] %v282
        %315 = vst [vmem:[%s309 + $0x28] sm:$0xff] %v284
        %316 = vst [vmem:[%s309 + $0x30] sm:$0xff] %v286
        %317 = vst [vmem:[%s309 + $0x38] sm:$0xff] %v288
        %318 = vst [vmem:[%s309 + $0x40] sm:$0xff] %v290
        %319 = vst [vmem:[%s309 + $0x48] sm:$0xff] %v292
        %320 = vst [vmem:[%s309 + $0x50] sm:$0xff] %v294
        %321 = vst [vmem:[%s309 + $0x58] sm:$0xff] %v296
        %v322 = vld [vmem:[%s134 + $0x20] sm:$0xf8]
        %v323 = vld [vmem:[%s134 + $0x28] sm:$0xf8]
        %v324 = vld [vmem:[%s134 + $0x30] sm:$0xff]
        %v325 = vld [vmem:[%s134 + $0x38] sm:$0xff]
        %v326 = vld [vmem:[%s134 + $0x40] sm:$0xff]
        %v327 = vld [vmem:[%s134 + $0x48] sm:$0xff]
        %v328 = vld [vmem:[%s134 + $0x50] sm:$0xff]
        %v329 = vld [vmem:[%s134 + $0x58] sm:$0xff]
        %v330 = vld [vmem:[%s134 + $0x60] sm:$0xff]
        %v331 = vld [vmem:[%s134 + $0x68] sm:$0xff]
        %v332 = vld [vmem:[%s134 + $0x70] sm:$0xff]
        %v333 = vld [vmem:[%s134 + $0x78] sm:$0xff]
        %vm346 = vcmask 1044480
        %v347 = vrot.slane %v322, 3
        %v348 = vrot.slane %v324, 3
        %v349 = vsel %vm346, %v347, %v348
        %v350 = vrot.slane %v323, 3
        %v351 = vrot.slane %v325, 3
        %v352 = vsel %vm346, %v350, %v351
        %v353 = vrot.slane %v326, 3
        %v354 = vsel %vm346, %v348, %v353
        %v355 = vrot.slane %v327, 3
        %v356 = vsel %vm346, %v351, %v355
        %v357 = vrot.slane %v328, 3
        %v358 = vsel %vm346, %v353, %v357
        %v359 = vrot.slane %v329, 3
        %v360 = vsel %vm346, %v355, %v359
        %v361 = vrot.slane %v330, 3
        %v362 = vsel %vm346, %v357, %v361
        %v363 = vrot.slane %v331, 3
        %v364 = vsel %vm346, %v359, %v363
        %v365 = vrot.slane %v332, 3
        %v366 = vsel %vm346, %v361, %v365
        %v367 = vrot.slane %v333, 3
        %v368 = vsel %vm346, %v363, %v367
        %v381 = vsel %vm346, %v365, 0.0
        %v382 = vsel %vm346, %v367, 0.0
        %s383 = scalar_lea.vmem %s152, 288 [#allocation5]
        %384 = vst [vmem:[%s383] sm:$0xff] %v349
        %385 = vst [vmem:[%s383 + $0x8] sm:$0xff] %v352
        %386 = vst [vmem:[%s383 + $0x10] sm:$0xff] %v354
        %387 = vst [vmem:[%s383 + $0x18] sm:$0xff] %v356
        %388 = vst [vmem:[%s383 + $0x20] sm:$0xff] %v358
        %389 = vst [vmem:[%s383 + $0x28] sm:$0xff] %v360
        %390 = vst [vmem:[%s383 + $0x30] sm:$0xff] %v362
        %391 = vst [vmem:[%s383 + $0x38] sm:$0xff] %v364
        %392 = vst [vmem:[%s383 + $0x40] sm:$0xff] %v366
        %393 = vst [vmem:[%s383 + $0x48] sm:$0xff] %v368
        %394 = vst [vmem:[%s383 + $0x50] sm:$0xff] %v381
        %395 = vst [vmem:[%s383 + $0x58] sm:$0xff] %v382
        %v396 = vld [vmem:[%s134 + $0x30] sm:$0xff]
        %v397 = vld [vmem:[%s134 + $0x38] sm:$0xff]
        %v398 = vld [vmem:[%s134 + $0x40] sm:$0xff]
        %v399 = vld [vmem:[%s134 + $0x48] sm:$0xff]
        %v400 = vld [vmem:[%s134 + $0x50] sm:$0xff]
        %v401 = vld [vmem:[%s134 + $0x58] sm:$0xff]
        %v402 = vld [vmem:[%s134 + $0x60] sm:$0xff]
        %v403 = vld [vmem:[%s134 + $0x68] sm:$0xff]
        %v404 = vld [vmem:[%s134 + $0x70] sm:$0xff]
        %v405 = vld [vmem:[%s134 + $0x78] sm:$0xff]
        %s406 = scalar_lea.vmem %s152, 384 [#allocation5]
        %407 = vst [vmem:[%s406] sm:$0xff] %v396
        %408 = vst [vmem:[%s406 + $0x8] sm:$0xff] %v397
        %409 = vst [vmem:[%s406 + $0x10] sm:$0xff] %v398
        %410 = vst [vmem:[%s406 + $0x18] sm:$0xff] %v399
        %411 = vst [vmem:[%s406 + $0x20] sm:$0xff] %v400
        %412 = vst [vmem:[%s406 + $0x28] sm:$0xff] %v401
        %413 = vst [vmem:[%s406 + $0x30] sm:$0xff] %v402
        %414 = vst [vmem:[%s406 + $0x38] sm:$0xff] %v403
        %415 = vst [vmem:[%s406 + $0x40] sm:$0xff] %v404
        %416 = vst [vmem:[%s406 + $0x48] sm:$0xff] %v405
        %417 = vst [vmem:[%s406 + $0x50] sm:$0xff] 0.0
        %418 = vst [vmem:[%s406 + $0x58] sm:$0xff] 0.0
        %s419 = sand.u32 %s68, 1
        %s420 = scalar_lea.sflag [#allocation4], %s419
        %s421 = sand.u32 %s68, 1
        %s422 = smul.addr %s421, 480
        %s423 = scalar_lea.vmem [#allocation5], %s422
        // Predicated region
        $region29: #{tpu_custom_call.1} parent=23 // pred_check
          %p424 = pneg %p78
        $region30: #{tpu_custom_call.1} parent=23 // pred_check_branch
          %426 = sbr.rel (%p424) target = $region32
        $region31: #{tpu_custom_call.1} parent=23 // pred_region
          %s427 = smul.u32 2, %s23
          %s429 = ssub.s32 7680, 7680
          %430 = vsyncadd %s420, %s429
          %s431 = smul.addr %s22, 60
          %s432 = sadd.s32 %s427, %s431
          %s433 = smul.addr %s432, 128
          %s434 = scalar_lea.hbm %s1, %s433
          %s435 = sshll.u32 %s423, 4
          %s436 = int_to_ptr.vmem [resolvable:$true] %s435
          %441 = dma.vmem_to_hbm [thread:$0]  %s436, 7680, %s434, %s420, 256, 256, 16
        $region32: #{tpu_custom_call.1} parent=23 // pred_fallthru
          _
      $region24: #{tpu_custom_call.1} parent=5 // pred_fallthru
        _
      %p442 = scmp.le.s32.totalorder 2, %s13
      // Predicated region
      $region33: #{tpu_custom_call.1} parent=5 // pred_check
        %p443 = pneg %p442
      $region34: #{tpu_custom_call.1} parent=5 // pred_check_branch
        %445 = sbr.rel (%p443) target = $region36
      $region35: #{tpu_custom_call.1} parent=5 // pred_region
        %s446 = ssub.s32 %s13, 2
        // Predicated region
        $region37: #{tpu_custom_call.1} parent=35 // pred_check
          %p447 = pneg %p84
        $region38: #{tpu_custom_call.1} parent=35 // pred_check_branch
          %449 = sbr.rel (%p447) target = $region40
        $region39: #{tpu_custom_call.1} parent=35 // pred_region
          %s450 = sand.u32 %s69, 1
          %s451 = scalar_lea.sflag [#allocation4], %s450
          %s452 = sand.u32 %s69, 1
          %s453 = smul.addr %s452, 480
          %s454 = scalar_lea.vmem [#allocation5], %s453
          %455 = dma.done %s451, 7680
        $region40: #{tpu_custom_call.1} parent=35 // pred_fallthru
          _
      $region36: #{tpu_custom_call.1} parent=5 // pred_fallthru
        _
    $region6: #{tpu_custom_call.1} parent=1 // loop_footer
      %s17 = sadd.s32 1, %s13
    $region7: #{tpu_custom_call.1} parent=1 // loop_footer_branch
      %12 = sbr.rel target = $region3
    $region8: #{tpu_custom_call.1} parent=1 // loop_exit
      _
    %456 = vsyncpa [#allocation3], 1
    %s457 = scalar_lea.sflag [#allocation3], 1
    %458 = vsyncpa %s457, 1
    %459 = vsyncpa [#allocation4], 1
    %s460 = scalar_lea.sflag [#allocation4], 1
    %461 = vsyncpa %s460, 1

</llo_original>
